<compile_context>
chip_gen: v5e
topology: v5e:2x2
jax: 0.10.0
libtpu: 0.0.40
codegen_flags: <defaults>
</compile_context>

<pallas_src>
import functools
import math

import jax
import jax.numpy as jnp
from jax.experimental import pallas as pl
from jax.experimental.pallas import tpu as pltpu

_BN_EPS = 1e-5
_VMEM = pl.BlockSpec(memory_space=pltpu.MemorySpace.VMEM)


def _ceil_to(x, m):
    return ((x + m - 1) // m) * m


def _pad_rows(m):
    """Round the im2col M dim to a friendly value: multiple of 8 (sublane-dense
    stores); multiple of 256 when it will be tiled so the 256-row tiles divide."""
    if m <= 256:
        return _ceil_to(m, 8)
    return _ceil_to(m, 256)


def _m_tile(mp):
    # mp is already a multiple of 256 whenever it exceeds 256 (see _pad_rows),
    # so 256-row tiles always divide.  Splitting the stem M gives 2 parallel
    # grid iterations (both v7x TensorCores) at negligible duplicated-weight cost.
    return mp if mp <= 256 else 256


def _n_tile(n):
    if n > 256:          # layer4 (N=512): 2 lane-dense 256-wide tiles
        if n % 256 == 0:
            return 256
        return 128 if n % 128 == 0 else n
    if n == 256:         # layer3: split so both v7x TensorCores get disjoint columns
        return 128
    return n             # full-dim block (legal even when < 128 lanes)


def _k_plan(k, tm, tn):
    """Prefer a single full-K block (no accumulator, no K padding, no K-grid
    overhead) whenever the double-buffered operand blocks fit a conservative
    VMEM budget; otherwise fall back to a 512-wide K tiling."""
    single_bytes = 2 * 2 * k * (tm + tn) + 6 * tm * tn
    if single_bytes <= 20 * 1024 * 1024:
        return k, k, False
    tk = 512
    return tk, _ceil_to(k, tk), True


# ---------------------------------------------------------------------------
# Pallas kernels
# ---------------------------------------------------------------------------

def _epilogue(acc, shift, extra, act, out_dtype):
    if act == "relu_then_bn":      # stem: bn1(relu(conv1(x))) -- affine AFTER the ReLU
        acc = jnp.maximum(acc, 0.0) * extra + shift
    elif act == "res_relu":        # BasicBlock conv2: bn + residual add + ReLU
        acc = jnp.maximum(acc + shift + extra.astype(jnp.float32), 0.0)
    else:
        acc = acc + shift
        if act == "relu":
            acc = jnp.maximum(acc, 0.0)
    return acc.astype(out_dtype)


def _mm_kernel(a_ref, b_ref, shift_ref, o_ref, *acc, act):
    """out = epilogue(a @ b + shift).  Single full-K step when no scratch is
    passed (o_ref written directly from the MXU result); otherwise K is tiled
    over grid axis 2 and accumulated in an f32 VMEM scratch."""
    if acc:
        acc_ref, = acc

        @pl.when(pl.program_id(2) == 0)
        def _():
            acc_ref[...] = jnp.zeros_like(acc_ref)

        acc_ref[...] += jnp.dot(a_ref[...], b_ref[...],
                                preferred_element_type=jnp.float32)

        @pl.when(pl.program_id(2) == pl.num_programs(2) - 1)
        def _():
            o_ref[...] = _epilogue(acc_ref[...], shift_ref[...], None, act,
                                   o_ref.dtype)
    else:
        acc_v = jnp.dot(a_ref[...], b_ref[...],
                        preferred_element_type=jnp.float32)
        o_ref[...] = _epilogue(acc_v, shift_ref[...], None, act, o_ref.dtype)


def _mm_extra_kernel(a_ref, b_ref, shift_ref, extra_ref, o_ref, *acc, act):
    """Same as _mm_kernel but with one extra operand: the stem's BN scale
    (act='relu_then_bn') or the BasicBlock residual (act='res_relu')."""
    if acc:
        acc_ref, = acc

        @pl.when(pl.program_id(2) == 0)
        def _():
            acc_ref[...] = jnp.zeros_like(acc_ref)

        acc_ref[...] += jnp.dot(a_ref[...], b_ref[...],
                                preferred_element_type=jnp.float32)

        @pl.when(pl.program_id(2) == pl.num_programs(2) - 1)
        def _():
            o_ref[...] = _epilogue(acc_ref[...], shift_ref[...], extra_ref[...],
                                   act, o_ref.dtype)
    else:
        acc_v = jnp.dot(a_ref[...], b_ref[...],
                        preferred_element_type=jnp.float32)
        o_ref[...] = _epilogue(acc_v, shift_ref[...], extra_ref[...], act,
                               o_ref.dtype)


def _maxpool_kernel(ee_ref, eo_ref, oe_ref, oo_ref, o_ref):
    """3x3 / stride-2 / pad-1 max pool from 4 phase-split views.
    Each phase ref is (N, Ho+1, Wo+1, C); output is (N, Ho, Wo, C)."""
    ho, wo = o_ref.shape[1], o_ref.shape[2]
    ee, eo, oe, oo = ee_ref[...], eo_ref[...], oe_ref[...], oo_ref[...]
    m = ee[:, :ho, :wo, :]
    m = jnp.maximum(m, ee[:, :ho, 1:, :])
    m = jnp.maximum(m, ee[:, 1:, :wo, :])
    m = jnp.maximum(m, ee[:, 1:, 1:, :])
    m = jnp.maximum(m, eo[:, :ho, :wo, :])
    m = jnp.maximum(m, eo[:, 1:, :wo, :])
    m = jnp.maximum(m, oe[:, :ho, :wo, :])
    m = jnp.maximum(m, oe[:, :ho, 1:, :])
    m = jnp.maximum(m, oo[:, :ho, :wo, :])
    o_ref[...] = m


def _adaptive_avgpool_kernel(x_ref, o_ref, *, bins):
    """Adaptive average pool; x_ref: (N, H*W, C) bf16, o_ref: (N, T, C) f32."""
    x = x_ref[...].astype(jnp.float32)
    outs = []
    for (s, e) in bins:
        outs.append(jnp.sum(x[:, s:e, :], axis=1, keepdims=True)
                    * (1.0 / float(e - s)))
    o_ref[...] = jnp.concatenate(outs, axis=1)


# ---------------------------------------------------------------------------
# Wrappers (glue: im2col / phase splits / reshapes)
# ---------------------------------------------------------------------------

def _fused_matmul(a, b, shift, extra, act):
    """a: (Mp, K) bf16, b: (K, N) bf16 (BN scale pre-folded unless stem),
    shift: (1, N) f32, extra: None | (1, N) f32 scale | (Mp, N) bf16 residual.
    Returns (Mp, N) bf16."""
    mp, k = a.shape
    _, n = b.shape
    tm, tn = _m_tile(mp), _n_tile(n)
    tk, kp, multi_k = _k_plan(k, tm, tn)
    if kp != k:  # multi-K fallback only: pad the contraction dim to the tile
        a = jnp.pad(a, ((0, 0), (0, kp - k)))
        b = jnp.pad(b, ((0, kp - k), (0, 0)))

    out_shape = jax.ShapeDtypeStruct((mp, n), jnp.bfloat16)
    cparams = pltpu.CompilerParams(
        dimension_semantics=(("parallel", "parallel", "arbitrary") if multi_k
                             else ("parallel", "parallel")),
        vmem_limit_bytes=32 * 1024 * 1024)

    if multi_k:
        grid = (mp // tm, n // tn, kp // tk)
        a_spec = pl.BlockSpec((tm, tk), lambda i, j, kk: (i, kk))
        b_spec = pl.BlockSpec((tk, tn), lambda i, j, kk: (kk, j))
        v_spec = pl.BlockSpec((1, tn), lambda i, j, kk: (0, j))
        r_spec = pl.BlockSpec((tm, tn), lambda i, j, kk: (i, j))
        o_spec = pl.BlockSpec((tm, tn), lambda i, j, kk: (i, j))
        scratch = [pltpu.VMEM((tm, tn), jnp.float32)]
    else:
        grid = (mp // tm, n // tn)
        a_spec = pl.BlockSpec((tm, kp), lambda i, j: (i, 0))
        b_spec = pl.BlockSpec((kp, tn), lambda i, j: (0, j))
        v_spec = pl.BlockSpec((1, tn), lambda i, j: (0, j))
        r_spec = pl.BlockSpec((tm, tn), lambda i, j: (i, j))
        o_spec = pl.BlockSpec((tm, tn), lambda i, j: (i, j))
        scratch = []

    if extra is None:
        kern = functools.partial(_mm_kernel, act=act)
        in_specs = [a_spec, b_spec, v_spec]
        args = (a, b, shift)
    else:
        kern = functools.partial(_mm_extra_kernel, act=act)
        e_spec = v_spec if act == "relu_then_bn" else r_spec
        in_specs = [a_spec, b_spec, v_spec, e_spec]
        args = (a, b, shift, extra)

    return pl.pallas_call(
        kern,
        out_shape=out_shape,
        grid_spec=pltpu.PrefetchScalarGridSpec(
            num_scalar_prefetch=0, grid=grid,
            in_specs=in_specs, out_specs=o_spec, scratch_shapes=scratch),
        compiler_params=cparams,
    )(*args)


@functools.partial(jax.jit, static_argnames=("kh", "kw", "stride", "pad", "act"))
def conv_bn_act(x, b, shift, scale=None, residual=None, *,
                kh, kw, stride, pad, act):
    """x: NHWC (bf16).  b: (K, Cout) bf16 pre-transposed / BN-scale-folded weight.
    Returns NHWC bf16 of shape (n, ho, wo, cout)."""
    n, h, w, cin = x.shape
    cout = b.shape[1]
    sh, sw = stride
    ph, pw = pad
    x = x.astype(jnp.bfloat16)
    xp = jnp.pad(x, ((0, 0), (ph, ph), (pw, pw), (0, 0))) if (ph or pw) else x
    ho = (h + 2 * ph - kh) // sh + 1
    wo = (w + 2 * pw - kw) // sw + 1
    # TODO(synk): form the kh*kw taps inside the kernel from a single VMEM copy of
    # xp (and fuse whole BasicBlocks into one pallas_call) to drop the
    # HBM-materialized im2col matrix and the per-conv XLA glue launches.
    cols = []
    for dy in range(kh):
        for dx in range(kw):
            cols.append(xp[:, dy:dy + sh * (ho - 1) + 1:sh,
                           dx:dx + sw * (wo - 1) + 1:sw, :])
    a = cols[0] if len(cols) == 1 else jnp.concatenate(cols, axis=-1)
    m = n * ho * wo
    a = a.reshape(m, kh * kw * cin)
    mp = _pad_rows(m)
    if mp != m:
        a = jnp.pad(a, ((0, mp - m), (0, 0)))

    extra = None
    if act == "relu_then_bn":
        extra = scale
    elif residual is not None:
        extra = residual.astype(jnp.bfloat16).reshape(m, cout)
        if mp != m:
            extra = jnp.pad(extra, ((0, mp - m), (0, 0)))

    out = _fused_matmul(a, b, shift, extra, act)
    if mp != m:
        out = out[:m]
    return out.reshape(n, ho, wo, cout)


@jax.jit
def maxpool_3x3_s2_p1(x):
    """nn.MaxPool2d(kernel_size=3, stride=2, padding=1) on NHWC."""
    n, h, w, c = x.shape
    ho = (h - 1) // 2 + 1
    wo = (w - 1) // 2 + 1
    hp, wp = 2 * ho + 2, 2 * wo + 2
    xp = jnp.pad(x, ((0, 0), (1, hp - h - 1), (1, wp - w - 1), (0, 0)),
                 constant_values=-jnp.inf)
    # 4-way phase split (~1x the data, tens of KiB here) instead of a 9x tap stack.
    # TODO(synk): for large inputs, pass xp once and use strided in-kernel reads
    # (ref[pl.ds(start, size, stride=2)]) with a gridded BlockSpec to avoid the
    # phase-split copies and the whole-array-in-VMEM form.
    ee = xp[:, 0::2, 0::2, :]
    eo = xp[:, 0::2, 1::2, :]
    oe = xp[:, 1::2, 0::2, :]
    oo = xp[:, 1::2, 1::2, :]
    return pl.pallas_call(
        _maxpool_kernel,
        out_shape=jax.ShapeDtypeStruct((n, ho, wo, c), x.dtype),
        in_specs=[_VMEM] * 4,
        out_specs=_VMEM,
    )(ee, eo, oe, oo)


@functools.partial(jax.jit, static_argnames=("t",))
def adaptive_avgpool_tx1(x, *, t):
    """nn.AdaptiveAvgPool2d((t, 1)) on NHWC, returns (N, t, C) float32."""
    n, h, w, c = x.shape
    # Output width 1 pools whole rows, so each (t,1) bin covers whole rows of the
    # flattened H*W axis (PyTorch adaptive bin edges along H).
    bins = tuple(
        (((i * h) // t) * w, (((i + 1) * h + t - 1) // t) * w) for i in range(t)
    )
    xf = x.reshape(n, h * w, c)
    return pl.pallas_call(
        functools.partial(_adaptive_avgpool_kernel, bins=bins),
        out_shape=jax.ShapeDtypeStruct((n, t, c), jnp.float32),
        in_specs=[_VMEM],
        out_specs=_VMEM,
    )(xf)


# ---------------------------------------------------------------------------
# Parameters (deterministic, matching the module's __init__; prepped for the kernels)
# ---------------------------------------------------------------------------

def _kaiming_fan_out(key, cout, cin, kh, kw):
    fan_out = cout * kh * kw
    std = math.sqrt(2.0 / fan_out)
    return std * jax.random.normal(key, (cout, cin, kh, kw), jnp.float32)


def _bn_affine(c):
    # eval-mode BN folded to scale/shift: gamma=1, beta=0, mean=0, var=1
    scale = jnp.full((c,), 1.0 / math.sqrt(1.0 + _BN_EPS), jnp.float32)
    shift = jnp.zeros((c,), jnp.float32)
    return scale, shift


def _prep_conv_bn(key, cout, cin, kh, kw, fold_scale=True):
    """Pre-transpose the conv weight to (K, Cout), fold the BN scale into it
    (except the stem, where ReLU precedes the affine), cast to bf16.
    No K padding: full-K blocks are used by the matmul kernel."""
    w = _kaiming_fan_out(key, cout, cin, kh, kw)
    scale, shift = _bn_affine(cout)
    b = jnp.transpose(w, (2, 3, 1, 0)).reshape(kh * kw * cin, cout)
    if fold_scale:
        b = b * scale[None, :]
    prepped = {"b": b.astype(jnp.bfloat16), "shift": shift.reshape(1, cout)}
    if not fold_scale:
        prepped["scale"] = scale.reshape(1, cout)
    return prepped
    # TODO(synk): optional int8 (v5e/v6e) / fp8 (v7x) weight quantization with
    # dequant folded into the epilogue to halve the weight-streaming bytes.


def init_params(key, chan_in):
    keys = iter(jax.random.split(key, 64))
    params = {
        "stem": _prep_conv_bn(next(keys), 64, chan_in, 7, 7, fold_scale=False),
        "layers": [],
    }

    def make_layer(n_blocks, cin, cout, first_stride):
        blocks = []
        for i in range(n_blocks):
            stride = first_stride if i == 0 else (1, 1)
            ci = cin if i == 0 else cout
            blk = {
                "conv1": _prep_conv_bn(next(keys), cout, ci, 3, 3),
                "conv2": _prep_conv_bn(next(keys), cout, cout, 3, 3),
                "stride": stride,
                "downsample": None,
            }
            if i == 0 and (ci != cout or stride != (1, 1)):
                blk["downsample"] = _prep_conv_bn(next(keys), cout, ci, 1, 1)
            blocks.append(blk)
        return blocks

    params["layers"].append(make_layer(3, 64, 64, (1, 1)))
    params["layers"].append(make_layer(4, 64, 128, (2, 2)))
    params["layers"].append(make_layer(6, 128, 256, (1, 2)))
    params["layers"].append(make_layer(3, 256, 512, (1, 2)))
    return params


# ---------------------------------------------------------------------------
# Forward pass
# ---------------------------------------------------------------------------

def basic_block(x, blk):
    stride = blk["stride"]
    c1, c2 = blk["conv1"], blk["conv2"]
    out = conv_bn_act(x, c1["b"], c1["shift"],
                      kh=3, kw=3, stride=stride, pad=(1, 1), act="relu")
    identity = x
    if blk["downsample"] is not None:
        ds = blk["downsample"]
        identity = conv_bn_act(x, ds["b"], ds["shift"],
                               kh=1, kw=1, stride=stride, pad=(0, 0), act="none")
    # second conv fused with BN affine + residual add + ReLU
    return conv_bn_act(out, c2["b"], c2["shift"], residual=identity,
                       kh=3, kw=3, stride=(1, 1), pad=(1, 1), act="res_relu")


def cnn_forward(params, x_nchw, time_step):
    x = jnp.transpose(x_nchw, (0, 2, 3, 1)).astype(jnp.bfloat16)  # NCHW -> NHWC
    stem = params["stem"]
    # model.py forward: maxpool(bn1(relu(conv1(x))))  -- ReLU BEFORE the BN affine.
    out = conv_bn_act(x, stem["b"], stem["shift"], stem["scale"],
                      kh=7, kw=7, stride=(2, 2), pad=(2, 2), act="relu_then_bn")
    out = maxpool_3x3_s2_p1(out)
    for layer in params["layers"]:
        for blk in layer:
            out = basic_block(out, blk)
    # PyTorch: avgpool -> (N,512,T,1) -> squeeze(3) -> transpose(1,2) -> (N,T,512)
    return adaptive_avgpool_tx1(out, t=time_step)


if __name__ == "__main__":
    key = jax.random.PRNGKey(0)
    k_param, k_x = jax.random.split(key)

    chan_in = 3
    time_step = 2
    batch, height, width = 2, 32, 32

    params = init_params(k_param, chan_in)
    x = jax.random.normal(k_x, (batch, chan_in, height, width), jnp.float32)

    out = cnn_forward(params, x, time_step)
    out = jax.block_until_ready(out)

    assert out.shape == (batch, time_step, 512), out.shape
    assert bool(jnp.all(jnp.isfinite(out)))
    print("KERNEL_OK")
</pallas_src>

<mosaic_0001>
module attributes {stable_mosaic.version = 11 : i64} {
  func.func @_mm_extra_kernel(%arg0: i32, %arg1: i32, %arg2: memref<256x147xbf16, #tpu.memory_space<vmem>>, %arg3: memref<147x64xbf16, #tpu.memory_space<vmem>>, %arg4: memref<1x64xf32, #tpu.memory_space<vmem>>, %arg5: memref<1x64xf32, #tpu.memory_space<vmem>>, %arg6: memref<256x64xbf16, #tpu.memory_space<vmem>>) attributes {dimension_semantics = [#tpu.dimension_semantics<parallel>, #tpu.dimension_semantics<parallel>], iteration_bounds = array<i64: 2, 1>, scalar_prefetch = 0 : i64, scratch_operands = 0 : i64, tpu.core_type = #tpu.core_type<tc>, window_params = [{transform_indices = @transform_0, window_bounds = array<i64: 256, 147>}, {transform_indices = @transform_1, window_bounds = array<i64: 147, 64>}, {transform_indices = @transform_2, window_bounds = array<i64: 1, 64>}, {transform_indices = @transform_3, window_bounds = array<i64: 1, 64>}, {transform_indices = @transform_4, window_bounds = array<i64: 256, 64>}]} {
    %c0 = arith.constant 0 : index
    %c0_0 = arith.constant 0 : index
    %0 = vector.load %arg2[%c0, %c0_0] : memref<256x147xbf16, #tpu.memory_space<vmem>>, vector<256x147xbf16>
    %c0_1 = arith.constant 0 : index
    %c0_2 = arith.constant 0 : index
    %1 = vector.load %arg3[%c0_1, %c0_2] : memref<147x64xbf16, #tpu.memory_space<vmem>>, vector<147x64xbf16>
    %cst = arith.constant dense<0.000000e+00> : vector<256x64xf32>
    %2 = tpu.matmul %0, %1, %cst {dimension_numbers = #tpu.dot_dimension_numbers<[1], [0], [0], [1], [0, 0, 1, 1], [], []>} : vector<256x147xbf16>, vector<147x64xbf16>, vector<256x64xf32> -> vector<256x64xf32>
    %c0_3 = arith.constant 0 : index
    %c0_4 = arith.constant 0 : index
    %3 = vector.load %arg4[%c0_3, %c0_4] : memref<1x64xf32, #tpu.memory_space<vmem>>, vector<1x64xf32>
    %c0_5 = arith.constant 0 : index
    %c0_6 = arith.constant 0 : index
    %4 = vector.load %arg5[%c0_5, %c0_6] : memref<1x64xf32, #tpu.memory_space<vmem>>, vector<1x64xf32>
    %cst_7 = arith.constant 0.000000e+00 : f32
    %5 = vector.broadcast %cst_7 : f32 to vector<256x64xf32>
    %6 = arith.maximumf %2, %5 : vector<256x64xf32>
    %7 = vector.broadcast %4 : vector<1x64xf32> to vector<256x64xf32>
    %8 = arith.mulf %6, %7 : vector<256x64xf32>
    %9 = vector.broadcast %3 : vector<1x64xf32> to vector<256x64xf32>
    %10 = arith.addf %8, %9 : vector<256x64xf32>
    %11 = arith.truncf %10 : vector<256x64xf32> to vector<256x64xbf16>
    %c0_8 = arith.constant 0 : index
    %c0_9 = arith.constant 0 : index
    %12 = vector.load %arg6[%c0_8, %c0_9] : memref<256x64xbf16, #tpu.memory_space<vmem>>, vector<256x64xbf16>
    tpu.vector_store %arg6[%c0_8, %c0_9], %11 {strides = array<i32>} : memref<256x64xbf16, #tpu.memory_space<vmem>>, vector<256x64xbf16>,
    return
  }
  func.func @transform_0(%arg0: i32, %arg1: i32) -> (i32, i32) {
    %c0_i32 = arith.constant 0 : i32
    %c0_i32_0 = arith.constant 0 : i32
    return %arg0, %c0_i32 : i32, i32
  }
  func.func @transform_1(%arg0: i32, %arg1: i32) -> (i32, i32) {
    %c0_i32 = arith.constant 0 : i32
    %c0_i32_0 = arith.constant 0 : i32
    return %c0_i32, %arg1 : i32, i32
  }
  func.func @transform_2(%arg0: i32, %arg1: i32) -> (i32, i32) {
    %c0_i32 = arith.constant 0 : i32
    %c0_i32_0 = arith.constant 0 : i32
    return %c0_i32, %arg1 : i32, i32
  }
  func.func @transform_3(%arg0: i32, %arg1: i32) -> (i32, i32) {
    %c0_i32 = arith.constant 0 : i32
    %c0_i32_0 = arith.constant 0 : i32
    return %c0_i32, %arg1 : i32, i32
  }
  func.func @transform_4(%arg0: i32, %arg1: i32) -> (i32, i32) {
    %c0_i32 = arith.constant 0 : i32
    return %arg0, %arg1 : i32, i32
  }
}

</mosaic_0001>

<llo_original>
// kernel: conv_bn_act.1
$region0: #{conv_bn_act.1}
  #allocation0 [shape = 'u32[]', space=smem, size = 0x4, offset = 0x4, fixed_abs, tag = 'smem constant byte address 0x4 - core index']
  #allocation1 [shape = 'u32[72,128]{1,0:T(1,128)}', space=vmem, size = 0x9000, scoped, tag = 'internal scratch']
  %s0 = inlined_call_operand.vmem [shape: bf16[512,147], index: 0, kind: input, shape index: {}]
  %s1 = inlined_call_operand.vmem [shape: bf16[147,64], index: 1, kind: input, shape index: {}]
  %s2 = inlined_call_operand.vmem [shape: f32[1,64], index: 2, kind: input, shape index: {}]
  %s3 = inlined_call_operand.vmem [shape: f32[1,64], index: 3, kind: input, shape index: {}]
  %s4 = inlined_call_operand.vmem [shape: bf16[512,64], index: 4, kind: output, shape index: {}]
  %s5 = sld [smem:[#allocation0]]
  $region49: #{conv_bn_act.1} parent=0
    _
  %s7 = ssub.s32 1, %s5
  %s8 = scalar_select 0, %s7, %s5
  loop: start=0, step=1, limit=4
  $region2: #{conv_bn_act.1} parent=0 // loop_pre_header
    _
  $region3: #{conv_bn_act.1} parent=0 // loop_header
    %s10 = sphi 0, %s14
    %p11 = scmp.ge.s32.totalorder %s10, 4
    %s17 = sphi 0, %s29
    %s18 = sphi 0, %s25
    %s19 = sphi 0, %s17
    %s20 = sphi 0, %s18
    %s21 = sphi 0, %s19
    %s22 = sphi 0, %s20
    %s32 = sphi 0, %s34
    %s35 = sphi 0, %s32
    %s36 = sphi 0, %s35
    %s52 = sphi 0, %s36
    %s58 = sphi 0, %s60
    %s61 = sphi 0, %s58
    %s62 = sphi 0, %s61
    %s78 = sphi 0, %s62
    %s84 = sphi 0, %s86
    %s87 = sphi 0, %s84
    %s88 = sphi 0, %s87
    %s104 = sphi 0, %s88
    %s110 = sphi 0, %s112
    %s113 = sphi 0, %s110
    %s114 = sphi 0, %s113
    %s130 = sphi 0, %s114
    %s138 = sphi 0, %s140
    %s141 = sphi 0, %s138
    %s142 = sphi 0, %s141
    %s158 = sphi 0, %s142
  $region4: #{conv_bn_act.1} parent=0 // loop_header_branch
    %13 = sbr.rel (%p11) target = $region8
  $region5: #{conv_bn_act.1} parent=0 // loop_body
    %s15 = ssub.s32 %s10, 1
    %s16 = ssub.s32 %s10, 2
    %s23 = sadd.s32 1, %s18
    %p24 = scmp.ge.s32.totalorder %s23, 1
    %s25 = scalar_select %p24, 0, %s23
    %s26 = sadd.s32 1, %s17
    %s27 = scalar_select %p24, %s26, %s17
    %p28 = scmp.ge.s32.totalorder %s27, 2
    %s29 = scalar_select %p28, 0, %s27
    %s30 = ssub.s32 %s17, %s29
    %p31 = scmp.eq.s32.totalorder %s30, 0
    %s33 = sadd.s32 %s32, 1
    %s34 = scalar_select %p31, %s32, %s33
    %p37 = pneg %p31
    %p38 = scmp.eq.s32.totalorder %s10, 1
    %p39 = por %p37, %p38
    %p40 = scmp.ne.s32.totalorder %s32, %s35
    %p41 = scmp.eq.s32.totalorder %s10, 0
    %p42 = por %p40, %p41
    %p43 = scmp.ne.s32.totalorder %s32, %s35
    %p44 = scmp.eq.s32.totalorder %s15, 1
    %p45 = por %p43, %p44
    %p46 = scmp.ne.s32.totalorder %s35, %s36
    %p47 = scmp.eq.s32.totalorder %s15, 0
    %p48 = por %p46, %p47
    %p49 = scmp.ne.s32.totalorder %s35, %s36
    %p50 = scmp.eq.s32.totalorder %s16, 1
    %p51 = por %p49, %p50
    %p53 = scmp.ne.s32.totalorder %s36, %s52
    %p54 = scmp.eq.s32.totalorder %s16, 0
    %p55 = por %p53, %p54
    %s56 = ssub.s32 %s18, %s25
    %p57 = scmp.eq.s32.totalorder %s56, 0
    %s59 = sadd.s32 %s58, 1
    %s60 = scalar_select %p57, %s58, %s59
    %p63 = pneg %p57
    %p64 = scmp.eq.s32.totalorder %s10, 1
    %p65 = por %p63, %p64
    %p66 = scmp.ne.s32.totalorder %s58, %s61
    %p67 = scmp.eq.s32.totalorder %s10, 0
    %p68 = por %p66, %p67
    %p69 = scmp.ne.s32.totalorder %s58, %s61
    %p70 = scmp.eq.s32.totalorder %s15, 1
    %p71 = por %p69, %p70
    %p72 = scmp.ne.s32.totalorder %s61, %s62
    %p73 = scmp.eq.s32.totalorder %s15, 0
    %p74 = por %p72, %p73
    %p75 = scmp.ne.s32.totalorder %s61, %s62
    %p76 = scmp.eq.s32.totalorder %s16, 1
    %p77 = por %p75, %p76
    %p79 = scmp.ne.s32.totalorder %s62, %s78
    %p80 = scmp.eq.s32.totalorder %s16, 0
    %p81 = por %p79, %p80
    %s82 = ssub.s32 %s18, %s25
    %p83 = scmp.eq.s32.totalorder %s82, 0
    %s85 = sadd.s32 %s84, 1
    %s86 = scalar_select %p83, %s84, %s85
    %p89 = pneg %p83
    %p90 = scmp.eq.s32.totalorder %s10, 1
    %p91 = por %p89, %p90
    %p92 = scmp.ne.s32.totalorder %s84, %s87
    %p93 = scmp.eq.s32.totalorder %s10, 0
    %p94 = por %p92, %p93
    %p95 = scmp.ne.s32.totalorder %s84, %s87
    %p96 = scmp.eq.s32.totalorder %s15, 1
    %p97 = por %p95, %p96
    %p98 = scmp.ne.s32.totalorder %s87, %s88
    %p99 = scmp.eq.s32.totalorder %s15, 0
    %p100 = por %p98, %p99
    %p101 = scmp.ne.s32.totalorder %s87, %s88
    %p102 = scmp.eq.s32.totalorder %s16, 1
    %p103 = por %p101, %p102
    %p105 = scmp.ne.s32.totalorder %s88, %s104
    %p106 = scmp.eq.s32.totalorder %s16, 0
    %p107 = por %p105, %p106
    %s108 = ssub.s32 %s18, %s25
    %p109 = scmp.eq.s32.totalorder %s108, 0
    %s111 = sadd.s32 %s110, 1
    %s112 = scalar_select %p109, %s110, %s111
    %p115 = pneg %p109
    %p116 = scmp.eq.s32.totalorder %s10, 1
    %p117 = por %p115, %p116
    %p118 = scmp.ne.s32.totalorder %s110, %s113
    %p119 = scmp.eq.s32.totalorder %s10, 0
    %p120 = por %p118, %p119
    %p121 = scmp.ne.s32.totalorder %s110, %s113
    %p122 = scmp.eq.s32.totalorder %s15, 1
    %p123 = por %p121, %p122
    %p124 = scmp.ne.s32.totalorder %s113, %s114
    %p125 = scmp.eq.s32.totalorder %s15, 0
    %p126 = por %p124, %p125
    %p127 = scmp.ne.s32.totalorder %s113, %s114
    %p128 = scmp.eq.s32.totalorder %s16, 1
    %p129 = por %p127, %p128
    %p131 = scmp.ne.s32.totalorder %s114, %s130
    %p132 = scmp.eq.s32.totalorder %s16, 0
    %p133 = por %p131, %p132
    %s134 = ssub.s32 %s17, %s29
    %s135 = ssub.s32 %s18, %s25
    %s136 = sor.u32 %s134, %s135
    %p137 = scmp.eq.s32.totalorder %s136, 0
    %s139 = sadd.s32 %s138, 1
    %s140 = scalar_select %p137, %s138, %s139
    %p143 = pneg %p137
    %p144 = scmp.eq.s32.totalorder %s10, 1
    %p145 = por %p143, %p144
    %p146 = scmp.ne.s32.totalorder %s138, %s141
    %p147 = scmp.eq.s32.totalorder %s10, 0
    %p148 = por %p146, %p147
    %p149 = scmp.ne.s32.totalorder %s138, %s141
    %p150 = scmp.eq.s32.totalorder %s15, 1
    %p151 = por %p149, %p150
    %p152 = scmp.ne.s32.totalorder %s141, %s142
    %p153 = scmp.eq.s32.totalorder %s15, 0
    %p154 = por %p152, %p153
    %p155 = scmp.ne.s32.totalorder %s141, %s142
    %p156 = scmp.eq.s32.totalorder %s16, 1
    %p157 = por %p155, %p156
    %p159 = scmp.ne.s32.totalorder %s142, %s158
    %p160 = scmp.eq.s32.totalorder %s16, 0
    %p161 = por %p159, %p160
    %p162 = scmp.le.s32.totalorder 1, %s10
    %p163 = scmp.lt.s32.totalorder %s10, 3
    %p164 = pnand %p162, %p163
    %p165 = pneg %p164
    // Predicated region
    $region9: #{conv_bn_act.1} parent=5 // pred_check
      _
    $region10: #{conv_bn_act.1} parent=5 // pred_check_branch
      %167 = sbr.rel (%p164) target = $region12
    $region11: #{conv_bn_act.1} parent=5 // pred_region
      %s168 = ssub.s32 %s10, 1
      // Predicated region
      $region13: #{conv_bn_act.1} parent=11 // pred_check
        %p169 = pneg %p74
      $region14: #{conv_bn_act.1} parent=11 // pred_check_branch
        %171 = sbr.rel (%p169) target = $region16
      $region15: #{conv_bn_act.1} parent=11 // pred_region
        %p172 = scmp.lt.s32.totalorder %s20, 0
        %s173 = scalar_select %p172, %s20, 0
        %s174 = smul.addr %s173, 4
        %s175 = scalar_lea.vmem %s1, %s174
      $region16: #{conv_bn_act.1} parent=11 // pred_fallthru
        _
      // Predicated region
      $region17: #{conv_bn_act.1} parent=11 // pred_check
        %p176 = pneg %p100
      $region18: #{conv_bn_act.1} parent=11 // pred_check_branch
        %178 = sbr.rel (%p176) target = $region20
      $region19: #{conv_bn_act.1} parent=11 // pred_region
        %p179 = scmp.lt.s32.totalorder %s20, 0
        %s180 = scalar_select %p179, %s20, 0
        %s181 = scalar_lea.vmem %s2, %s180
      $region20: #{conv_bn_act.1} parent=11 // pred_fallthru
        _
      // Predicated region
      $region21: #{conv_bn_act.1} parent=11 // pred_check
        %p182 = pneg %p126
      $region22: #{conv_bn_act.1} parent=11 // pred_check_branch
        %184 = sbr.rel (%p182) target = $region24
      $region23: #{conv_bn_act.1} parent=11 // pred_region
        %p185 = scmp.lt.s32.totalorder %s20, 0
        %s186 = scalar_select %p185, %s20, 0
        %s187 = scalar_lea.vmem %s3, %s186
      $region24: #{conv_bn_act.1} parent=11 // pred_fallthru
        _
    $region12: #{conv_bn_act.1} parent=5 // pred_fallthru
      _
    %p188 = scmp.lt.s32.totalorder %s10, 2
    // Predicated region
    $region25: #{conv_bn_act.1} parent=5 // pred_check
      %p189 = pneg %p188
    $region26: #{conv_bn_act.1} parent=5 // pred_check_branch
      %191 = sbr.rel (%p189) target = $region28
    $region27: #{conv_bn_act.1} parent=5 // pred_region
      // Predicated region
      $region29: #{conv_bn_act.1} parent=27 // pred_check
        %p192 = pneg %p42
      $region30: #{conv_bn_act.1} parent=27 // pred_check_branch
        %194 = sbr.rel (%p192) target = $region32
      $region31: #{conv_bn_act.1} parent=27 // pred_region
        %s195 = smul.u32 32, %s17
        %p196 = scmp.lt.s32.totalorder %s195, 63
        %s197 = scalar_select %p196, %s195, 63
        %s198 = smul.addr %s197, 2
        %s199 = smul.addr %s198, 4
        %s200 = scalar_lea.vmem %s0, %s199
        %s201 = smul.u32 32, %s17
      $region32: #{conv_bn_act.1} parent=27 // pred_fallthru
        _
    $region28: #{conv_bn_act.1} parent=5 // pred_fallthru
      _
    %p202 = scmp.le.s32.totalorder 1, %s10
    %p203 = scmp.lt.s32.totalorder %s10, 3
    %p204 = pnand %p202, %p203
    %p205 = pneg %p204
    // Predicated region
    $region33: #{conv_bn_act.1} parent=5 // pred_check
      _
    $region34: #{conv_bn_act.1} parent=5 // pred_check_branch
      %207 = sbr.rel (%p204) target = $region36
    $region35: #{conv_bn_act.1} parent=5 // pred_region
      %s208 = ssub.s32 %s10, 1
      %s209 = smul.u32 32, %s19
      %p210 = scmp.lt.s32.totalorder %s209, 63
      %s211 = scalar_select %p210, %s209, 63
      %s212 = smul.addr %s211, 2
      %s213 = smul.addr %s212, 4
      %s214 = scalar_lea.vmem %s0, %s213
      %p215 = pneg %p48
      %p216 = pneg %p45
      %p217 = scmp.lt.s32.totalorder %s20, 0
      %s218 = scalar_select %p217, %s20, 0
      %s219 = smul.addr %s218, 4
      %s220 = scalar_lea.vmem %s1, %s219
      %p221 = pneg %p74
      %p222 = pneg %p71
      %p223 = scmp.lt.s32.totalorder %s20, 0
      %s224 = scalar_select %p223, %s20, 0
      %s225 = scalar_lea.vmem %s2, %s224
      %p226 = pneg %p100
      %p227 = pneg %p97
      %p228 = scmp.lt.s32.totalorder %s20, 0
      %s229 = scalar_select %p228, %s20, 0
      %s230 = scalar_lea.vmem %s3, %s229
      %p231 = pneg %p126
      %p232 = pneg %p123
      %p233 = pneg %p154
      %p234 = pneg %p151
      %s235 = smul.u32 32, %s19
      %p236 = scmp.lt.s32.totalorder %s235, 63
      %s237 = scalar_select %p236, %s235, 63
      %p238 = scmp.lt.s32.totalorder %s20, 0
      %s239 = scalar_select %p238, %s20, 0
      %s240 = sadd.s32 %s239, %s237
      %s241 = smul.addr %s240, 4
      %s242 = scalar_lea.vmem %s4, %s241
      %s243 = smul.u32 32, %s19
      %p244 = scmp.lt.s32.totalorder %s243, 63
      %s245 = scalar_select %p244, %s243, 63
      %s246 = smul.addr %s245, 2
      %s247 = smul.addr %s246, 4
      %s248 = scalar_lea.vmem %s0, %s247
      %s249 = smul.u32 32, %s19
      %p250 = scmp.lt.s32.totalorder %s20, 0
      %s251 = scalar_select %p250, %s20, 0
      %s252 = smul.addr %s251, 4
      %s253 = scalar_lea.vmem %s1, %s252
      %p254 = scmp.lt.s32.totalorder %s20, 0
      %s255 = scalar_select %p254, %s20, 0
      %s256 = scalar_lea.vmem %s2, %s255
      %p257 = scmp.lt.s32.totalorder %s20, 0
      %s258 = scalar_select %p257, %s20, 0
      %s259 = scalar_lea.vmem %s3, %s258
      %s260 = smul.u32 32, %s19
      %p261 = scmp.lt.s32.totalorder %s260, 63
      %s262 = scalar_select %p261, %s260, 63
      %p263 = scmp.lt.s32.totalorder %s20, 0
      %s264 = scalar_select %p263, %s20, 0
      %s265 = sadd.s32 %s264, %s262
      %s266 = smul.addr %s265, 4
      %s267 = scalar_lea.vmem %s4, %s266
      %s268 = smul.u32 32, %s19
      %v270 = vld [vmem:[%s248] sm:$0xff]
      %v271 = vld [vmem:[%s248 + $0x8] sm:$0xff]
      %v272 = vld [vmem:[%s248 + $0x10] sm:$0xff]
      %v273 = vld [vmem:[%s248 + $0x18] sm:$0xff]
      %v274 = vld [vmem:[%s248 + $0x20] sm:$0xff]
      %v275 = vld [vmem:[%s248 + $0x28] sm:$0xff]
      %v276 = vld [vmem:[%s248 + $0x30] sm:$0xff]
      %v277 = vld [vmem:[%s248 + $0x38] sm:$0xff]
      %v278 = vld [vmem:[%s248 + $0x40] sm:$0xff]
      %v279 = vld [vmem:[%s248 + $0x48] sm:$0xff]
      %v280 = vld [vmem:[%s248 + $0x50] sm:$0xff]
      %v281 = vld [vmem:[%s248 + $0x58] sm:$0xff]
      %v282 = vld [vmem:[%s248 + $0x60] sm:$0xff]
      %v283 = vld [vmem:[%s248 + $0x68] sm:$0xff]
      %v284 = vld [vmem:[%s248 + $0x70] sm:$0xff]
      %v285 = vld [vmem:[%s248 + $0x78] sm:$0xff]
      %v286 = vld [vmem:[%s248 + $0x80] sm:$0xff]
      %v287 = vld [vmem:[%s248 + $0x88] sm:$0xff]
      %v288 = vld [vmem:[%s248 + $0x90] sm:$0xff]
      %v289 = vld [vmem:[%s248 + $0x98] sm:$0xff]
      %v290 = vld [vmem:[%s248 + $0xa0] sm:$0xff]
      %v291 = vld [vmem:[%s248 + $0xa8] sm:$0xff]
      %v292 = vld [vmem:[%s248 + $0xb0] sm:$0xff]
      %v293 = vld [vmem:[%s248 + $0xb8] sm:$0xff]
      %v294 = vld [vmem:[%s248 + $0xc0] sm:$0xff]
      %v295 = vld [vmem:[%s248 + $0xc8] sm:$0xff]
      %v296 = vld [vmem:[%s248 + $0xd0] sm:$0xff]
      %v297 = vld [vmem:[%s248 + $0xd8] sm:$0xff]
      %v298 = vld [vmem:[%s248 + $0xe0] sm:$0xff]
      %v299 = vld [vmem:[%s248 + $0xe8] sm:$0xff]
      %v300 = vld [vmem:[%s248 + $0xf0] sm:$0xff]
      %v301 = vld [vmem:[%s248 + $0xf8] sm:$0xff]
      %v302 = vld [vmem:[%s253] sm:$0xf]
      %v303 = vld [vmem:[%s253 + $0x4] sm:$0xf]
      %v304 = vld [vmem:[%s253 + $0x8] sm:$0xf]
      %v305 = vld [vmem:[%s253 + $0xc] sm:$0xf]
      %v306 = vld [vmem:[%s253 + $0x10] sm:$0xf]
      %v307 = vld [vmem:[%s253 + $0x14] sm:$0xf]
      %v308 = vld [vmem:[%s253 + $0x18] sm:$0xf]
      %v309 = vld [vmem:[%s253 + $0x1c] sm:$0xf]
      %v310 = vld [vmem:[%s253 + $0x20] sm:$0xf]
      %v311 = vld [vmem:[%s253 + $0x24] sm:$0xf]
      %v312 = vld [vmem:[%s253 + $0x28] sm:$0xf]
      %v313 = vld [vmem:[%s253 + $0x2c] sm:$0xf]
      %v314 = vld [vmem:[%s253 + $0x30] sm:$0xf]
      %v315 = vld [vmem:[%s253 + $0x34] sm:$0xf]
      %v316 = vld [vmem:[%s253 + $0x38] sm:$0xf]
      %v317 = vld [vmem:[%s253 + $0x3c] sm:$0xf]
      %v318 = vld [vmem:[%s253 + $0x40] sm:$0xf]
      %v319 = vld [vmem:[%s253 + $0x44] sm:$0xf]
      %v320 = vld [vmem:[%s253 + $0x48] sm:$0x3]
      %v353 = vunpack.c.l.b16 %v270
      %v354 = vunpack.c.h.b16 %v270
      %v355 = vunpack.c.l.b16 %v271
      %v356 = vunpack.c.h.b16 %v271
      %v357 = vunpack.c.l.b16 %v272
      %v358 = vunpack.c.h.b16 %v272
      %v359 = vunpack.c.l.b16 %v273
      %v360 = vunpack.c.h.b16 %v273
      %v361 = vunpack.c.l.b16 %v274
      %v362 = vunpack.c.h.b16 %v274
      %v363 = vunpack.c.l.b16 %v275
      %v364 = vunpack.c.h.b16 %v275
      %v365 = vunpack.c.l.b16 %v276
      %v366 = vunpack.c.h.b16 %v276
      %v367 = vunpack.c.l.b16 %v277
      %v368 = vunpack.c.h.b16 %v277
      %v369 = vunpack.c.l.b16 %v278
      %v370 = vunpack.c.h.b16 %v278
      %v371 = vunpack.c.l.b16 %v279
      %v372 = vunpack.c.h.b16 %v279
      %v373 = vunpack.c.l.b16 %v280
      %v374 = vunpack.c.h.b16 %v280
      %v375 = vunpack.c.l.b16 %v281
      %v376 = vunpack.c.h.b16 %v281
      %v377 = vunpack.c.l.b16 %v282
      %v378 = vunpack.c.h.b16 %v282
      %v379 = vunpack.c.l.b16 %v283
      %v380 = vunpack.c.h.b16 %v283
      %v381 = vunpack.c.l.b16 %v284
      %v382 = vunpack.c.h.b16 %v284
      %v383 = vunpack.c.l.b16 %v285
      %v384 = vunpack.c.h.b16 %v285
      %v385 = vunpack.c.l.b16 %v286
      %v386 = vunpack.c.h.b16 %v286
      %v387 = vunpack.c.l.b16 %v287
      %v388 = vunpack.c.h.b16 %v287
      %v389 = vunpack.c.l.b16 %v288
      %v390 = vunpack.c.h.b16 %v288
      %v391 = vunpack.c.l.b16 %v289
      %v392 = vunpack.c.h.b16 %v289
      %v393 = vunpack.c.l.b16 %v290
      %v394 = vunpack.c.h.b16 %v290
      %v395 = vunpack.c.l.b16 %v291
      %v396 = vunpack.c.h.b16 %v291
      %v397 = vunpack.c.l.b16 %v292
      %v398 = vunpack.c.h.b16 %v292
      %v399 = vunpack.c.l.b16 %v293
      %v400 = vunpack.c.h.b16 %v293
      %v401 = vunpack.c.l.b16 %v294
      %v402 = vunpack.c.h.b16 %v294
      %v403 = vunpack.c.l.b16 %v295
      %v404 = vunpack.c.h.b16 %v295
      %v405 = vunpack.c.l.b16 %v296
      %v406 = vunpack.c.h.b16 %v296
      %v407 = vunpack.c.l.b16 %v297
      %v408 = vunpack.c.h.b16 %v297
      %v409 = vunpack.c.l.b16 %v298
      %v410 = vunpack.c.h.b16 %v298
      %v411 = vunpack.c.l.b16 %v299
      %v412 = vunpack.c.h.b16 %v299
      %v413 = vunpack.c.l.b16 %v300
      %v414 = vunpack.c.h.b16 %v300
      %v415 = vunpack.c.l.b16 %v301
      %v416 = vunpack.c.h.b16 %v301
      %v417 = vpack.c.b16 %v355, %v353
      %v418 = vpack.c.b16 %v356, %v354
      %v419 = vpack.c.b16 %v359, %v357
      %v420 = vpack.c.b16 %v360, %v358
      %v421 = vpack.c.b16 %v363, %v361
      %v422 = vpack.c.b16 %v364, %v362
      %v423 = vpack.c.b16 %v367, %v365
      %v424 = vpack.c.b16 %v368, %v366
      %v425 = vpack.c.b16 %v371, %v369
      %v426 = vpack.c.b16 %v372, %v370
      %v427 = vpack.c.b16 %v375, %v373
      %v428 = vpack.c.b16 %v376, %v374
      %v429 = vpack.c.b16 %v379, %v377
      %v430 = vpack.c.b16 %v380, %v378
      %v431 = vpack.c.b16 %v383, %v381
      %v432 = vpack.c.b16 %v384, %v382
      %v433 = vpack.c.b16 %v387, %v385
      %v434 = vpack.c.b16 %v388, %v386
      %v435 = vpack.c.b16 %v391, %v389
      %v436 = vpack.c.b16 %v392, %v390
      %v437 = vpack.c.b16 %v395, %v393
      %v438 = vpack.c.b16 %v396, %v394
      %v439 = vpack.c.b16 %v399, %v397
      %v440 = vpack.c.b16 %v400, %v398
      %v441 = vpack.c.b16 %v403, %v401
      %v442 = vpack.c.b16 %v404, %v402
      %v443 = vpack.c.b16 %v407, %v405
      %v444 = vpack.c.b16 %v408, %v406
      %v445 = vpack.c.b16 %v411, %v409
      %v446 = vpack.c.b16 %v412, %v410
      %v447 = vpack.c.b16 %v415, %v413
      %v448 = vpack.c.b16 %v416, %v414
      %v484 = vunpack.c.l.b16 %v302
      %v485 = vunpack.c.l.b16 %v303
      %v486 = vunpack.c.l.b16 %v304
      %v487 = vunpack.c.l.b16 %v305
      %v488 = vunpack.c.l.b16 %v306
      %v489 = vunpack.c.l.b16 %v307
      %v490 = vunpack.c.l.b16 %v308
      %v491 = vunpack.c.l.b16 %v309
      %v492 = vunpack.c.l.b16 %v310
      %v493 = vunpack.c.l.b16 %v311
      %v494 = vunpack.c.l.b16 %v312
      %v495 = vunpack.c.l.b16 %v313
      %v496 = vunpack.c.l.b16 %v314
      %v497 = vunpack.c.l.b16 %v315
      %v498 = vunpack.c.l.b16 %v316
      %v499 = vunpack.c.l.b16 %v317
      %v500 = vunpack.c.l.b16 %v318
      %v501 = vunpack.c.l.b16 %v319
      %v502 = vunpack.c.l.b16 %v320
      %v503 = vpack.c.b16 %v485, %v484
      %v504 = vpack.c.b16 %v487, %v486
      %v505 = vpack.c.b16 %v489, %v488
      %v506 = vpack.c.b16 %v491, %v490
      %v507 = vpack.c.b16 %v493, %v492
      %v508 = vpack.c.b16 %v495, %v494
      %v509 = vpack.c.b16 %v497, %v496
      %v510 = vpack.c.b16 %v499, %v498
      %v511 = vpack.c.b16 %v501, %v500
      %v512 = vpack.c.b16 %v502, %v502
      %vm522 = vcmask 154624
      %v524 = vsel %vm522, %v418, 0
      %v527 = vsel %vm522, %v420, 0
      %v530 = vsel %vm522, %v422, 0
      %v533 = vsel %vm522, %v424, 0
      %v536 = vsel %vm522, %v426, 0
      %v539 = vsel %vm522, %v428, 0
      %v542 = vsel %vm522, %v430, 0
      %v545 = vsel %vm522, %v432, 0
      %v548 = vsel %vm522, %v434, 0
      %v551 = vsel %vm522, %v436, 0
      %v554 = vsel %vm522, %v438, 0
      %v557 = vsel %vm522, %v440, 0
      %v560 = vsel %vm522, %v442, 0
      %v563 = vsel %vm522, %v444, 0
      %v566 = vsel %vm522, %v446, 0
      %v569 = vsel %vm522, %v448, 0
      %vm571 = vcmask 1040384
      %vm572 = vcmask 1041408
      %v573 = vsel %vm571, 4294967295, 65535
      %v574 = vsel %vm572, %v573, 0
      %v576 = vand.u32 %v512, %v574
      %578 = vmatpush.bf16.msra.mxu0 %v510
      %579 = vmatpush.bf16.msra.mxu0 %v509
      %580 = vmatpush.bf16.msra.mxu0 %v508
      %581 = vmatpush.bf16.msra.mxu0 %v507
      %582 = vmatpush.bf16.msra.mxu0 %v506
      %583 = vmatpush.bf16.msra.mxu0 %v505
      %584 = vmatpush.bf16.msra.mxu0 %v504
      %585 = vmatpush.bf16.msra.mxu0 %v503
      %586 = vmatmul.bf16.gmra.mxu0 %v417
      %v587 = vpop.f32.mrf.mxu0
      %v588 = vadd.f32 0.0, %v587
      %v589 = vpop.f32.mrf.mxu0
      %v590 = vadd.f32 0.0, %v589
      %591 = vmatmul.bf16.gmra.mxu0 %v419
      %v592 = vpop.f32.mrf.mxu0
      %v593 = vadd.f32 0.0, %v592
      %v594 = vpop.f32.mrf.mxu0
      %v595 = vadd.f32 0.0, %v594
      %596 = vmatmul.bf16.gmra.mxu0 %v421
      %v597 = vpop.f32.mrf.mxu0
      %v598 = vadd.f32 0.0, %v597
      %v599 = vpop.f32.mrf.mxu0
      %v600 = vadd.f32 0.0, %v599
      %601 = vmatmul.bf16.gmra.mxu0 %v423
      %v602 = vpop.f32.mrf.mxu0
      %v603 = vadd.f32 0.0, %v602
      %v604 = vpop.f32.mrf.mxu0
      %v605 = vadd.f32 0.0, %v604
      %606 = vmatmul.bf16.gmra.mxu0 %v425
      %v607 = vpop.f32.mrf.mxu0
      %v608 = vadd.f32 0.0, %v607
      %v609 = vpop.f32.mrf.mxu0
      %v610 = vadd.f32 0.0, %v609
      %611 = vmatmul.bf16.gmra.mxu0 %v427
      %v612 = vpop.f32.mrf.mxu0
      %v613 = vadd.f32 0.0, %v612
      %v614 = vpop.f32.mrf.mxu0
      %v615 = vadd.f32 0.0, %v614
      %616 = vmatmul.bf16.gmra.mxu0 %v429
      %v617 = vpop.f32.mrf.mxu0
      %v618 = vadd.f32 0.0, %v617
      %v619 = vpop.f32.mrf.mxu0
      %v620 = vadd.f32 0.0, %v619
      %621 = vmatmul.bf16.gmra.mxu0 %v431
      %v622 = vpop.f32.mrf.mxu0
      %v623 = vadd.f32 0.0, %v622
      %v624 = vpop.f32.mrf.mxu0
      %v625 = vadd.f32 0.0, %v624
      %626 = vmatmul.bf16.gmra.mxu0 %v433
      %v627 = vpop.f32.mrf.mxu0
      %v628 = vadd.f32 0.0, %v627
      %v629 = vpop.f32.mrf.mxu0
      %v630 = vadd.f32 0.0, %v629
      %631 = vmatmul.bf16.gmra.mxu0 %v435
      %v632 = vpop.f32.mrf.mxu0
      %v633 = vadd.f32 0.0, %v632
      %v634 = vpop.f32.mrf.mxu0
      %v635 = vadd.f32 0.0, %v634
      %636 = vmatmul.bf16.gmra.mxu0 %v437
      %v637 = vpop.f32.mrf.mxu0
      %v638 = vadd.f32 0.0, %v637
      %v639 = vpop.f32.mrf.mxu0
      %v640 = vadd.f32 0.0, %v639
      %641 = vmatmul.bf16.gmra.mxu0 %v439
      %v642 = vpop.f32.mrf.mxu0
      %v643 = vadd.f32 0.0, %v642
      %v644 = vpop.f32.mrf.mxu0
      %v645 = vadd.f32 0.0, %v644
      %646 = vmatmul.bf16.gmra.mxu0 %v441
      %v647 = vpop.f32.mrf.mxu0
      %v648 = vadd.f32 0.0, %v647
      %v649 = vpop.f32.mrf.mxu0
      %v650 = vadd.f32 0.0, %v649
      %651 = vmatmul.bf16.gmra.mxu0 %v443
      %v652 = vpop.f32.mrf.mxu0
      %v653 = vadd.f32 0.0, %v652
      %v654 = vpop.f32.mrf.mxu0
      %v655 = vadd.f32 0.0, %v654
      %656 = vmatmul.bf16.gmra.mxu0 %v445
      %v657 = vpop.f32.mrf.mxu0
      %v658 = vadd.f32 0.0, %v657
      %v659 = vpop.f32.mrf.mxu0
      %v660 = vadd.f32 0.0, %v659
      %661 = vmatmul.bf16.gmra.mxu0 %v447
      %v662 = vpop.f32.mrf.mxu0
      %v663 = vadd.f32 0.0, %v662
      %v664 = vpop.f32.mrf.mxu0
      %v665 = vadd.f32 0.0, %v664
      %666 = vdwg.mxu0
      %667 = vmatpush.bf16.msra.mxu0 0
      %668 = vmatpush.bf16.msra.mxu0 0
      %669 = vmatpush.bf16.msra.mxu0 0
      %670 = vmatpush.bf16.msra.mxu0 0
      %671 = vmatpush.bf16.msra.mxu0 0
      %672 = vmatpush.bf16.msra.mxu0 0
      %673 = vmatpush.bf16.msra.mxu0 %v576
      %674 = vmatpush.bf16.msra.mxu0 %v511
      %675 = vmatmul.bf16.gmra.mxu0 %v524
      %v676 = vpop.f32.mrf.mxu0
      %v677 = vadd.f32 %v588, %v676
      %v678 = vpop.f32.mrf.mxu0
      %v679 = vadd.f32 %v590, %v678
      %680 = vmatmul.bf16.gmra.mxu0 %v527
      %v681 = vpop.f32.mrf.mxu0
      %v682 = vadd.f32 %v593, %v681
      %v683 = vpop.f32.mrf.mxu0
      %v684 = vadd.f32 %v595, %v683
      %685 = vmatmul.bf16.gmra.mxu0 %v530
      %v686 = vpop.f32.mrf.mxu0
      %v687 = vadd.f32 %v598, %v686
      %v688 = vpop.f32.mrf.mxu0
      %v689 = vadd.f32 %v600, %v688
      %690 = vmatmul.bf16.gmra.mxu0 %v533
      %v691 = vpop.f32.mrf.mxu0
      %v692 = vadd.f32 %v603, %v691
      %v693 = vpop.f32.mrf.mxu0
      %v694 = vadd.f32 %v605, %v693
      %695 = vmatmul.bf16.gmra.mxu0 %v536
      %v696 = vpop.f32.mrf.mxu0
      %v697 = vadd.f32 %v608, %v696
      %v698 = vpop.f32.mrf.mxu0
      %v699 = vadd.f32 %v610, %v698
      %700 = vmatmul.bf16.gmra.mxu0 %v539
      %v701 = vpop.f32.mrf.mxu0
      %v702 = vadd.f32 %v613, %v701
      %v703 = vpop.f32.mrf.mxu0
      %v704 = vadd.f32 %v615, %v703
      %705 = vmatmul.bf16.gmra.mxu0 %v542
      %v706 = vpop.f32.mrf.mxu0
      %v707 = vadd.f32 %v618, %v706
      %v708 = vpop.f32.mrf.mxu0
      %v709 = vadd.f32 %v620, %v708
      %710 = vmatmul.bf16.gmra.mxu0 %v545
      %v711 = vpop.f32.mrf.mxu0
      %v712 = vadd.f32 %v623, %v711
      %v713 = vpop.f32.mrf.mxu0
      %v714 = vadd.f32 %v625, %v713
      %715 = vmatmul.bf16.gmra.mxu0 %v548
      %v716 = vpop.f32.mrf.mxu0
      %v717 = vadd.f32 %v628, %v716
      %v718 = vpop.f32.mrf.mxu0
      %v719 = vadd.f32 %v630, %v718
      %720 = vmatmul.bf16.gmra.mxu0 %v551
      %v721 = vpop.f32.mrf.mxu0
      %v722 = vadd.f32 %v633, %v721
      %v723 = vpop.f32.mrf.mxu0
      %v724 = vadd.f32 %v635, %v723
      %725 = vmatmul.bf16.gmra.mxu0 %v554
      %v726 = vpop.f32.mrf.mxu0
      %v727 = vadd.f32 %v638, %v726
      %v728 = vpop.f32.mrf.mxu0
      %v729 = vadd.f32 %v640, %v728
      %730 = vmatmul.bf16.gmra.mxu0 %v557
      %v731 = vpop.f32.mrf.mxu0
      %v732 = vadd.f32 %v643, %v731
      %v733 = vpop.f32.mrf.mxu0
      %v734 = vadd.f32 %v645, %v733
      %735 = vmatmul.bf16.gmra.mxu0 %v560
      %v736 = vpop.f32.mrf.mxu0
      %v737 = vadd.f32 %v648, %v736
      %v738 = vpop.f32.mrf.mxu0
      %v739 = vadd.f32 %v650, %v738
      %740 = vmatmul.bf16.gmra.mxu0 %v563
      %v741 = vpop.f32.mrf.mxu0
      %v742 = vadd.f32 %v653, %v741
      %v743 = vpop.f32.mrf.mxu0
      %v744 = vadd.f32 %v655, %v743
      %745 = vmatmul.bf16.gmra.mxu0 %v566
      %v746 = vpop.f32.mrf.mxu0
      %v747 = vadd.f32 %v658, %v746
      %v748 = vpop.f32.mrf.mxu0
      %v749 = vadd.f32 %v660, %v748
      %750 = vmatmul.bf16.gmra.mxu0 %v569
      %v751 = vpop.f32.mrf.mxu0
      %v752 = vadd.f32 %v663, %v751
      %v753 = vpop.f32.mrf.mxu0
      %v754 = vadd.f32 %v665, %v753
      %755 = vdwg.mxu0
      %v756 = vld [vmem:[%s256] sm:$0x1]
      %v757 = vld [vmem:[%s259] sm:$0x1]
      %v758 = vmax.f32 %v677, 0.0
      %v759 = vmax.f32 %v679, 0.0
      %v760 = vmax.f32 %v682, 0.0
      %v761 = vmax.f32 %v684, 0.0
      %v762 = vmax.f32 %v687, 0.0
      %v763 = vmax.f32 %v689, 0.0
      %v764 = vmax.f32 %v692, 0.0
      %v765 = vmax.f32 %v694, 0.0
      %v766 = vmax.f32 %v697, 0.0
      %v767 = vmax.f32 %v699, 0.0
      %v768 = vmax.f32 %v702, 0.0
      %v769 = vmax.f32 %v704, 0.0
      %v770 = vmax.f32 %v707, 0.0
      %v771 = vmax.f32 %v709, 0.0
      %v772 = vmax.f32 %v712, 0.0
      %v773 = vmax.f32 %v714, 0.0
      %v774 = vmax.f32 %v717, 0.0
      %v775 = vmax.f32 %v719, 0.0
      %v776 = vmax.f32 %v722, 0.0
      %v777 = vmax.f32 %v724, 0.0
      %v778 = vmax.f32 %v727, 0.0
      %v779 = vmax.f32 %v729, 0.0
      %v780 = vmax.f32 %v732, 0.0
      %v781 = vmax.f32 %v734, 0.0
      %v782 = vmax.f32 %v737, 0.0
      %v783 = vmax.f32 %v739, 0.0
      %v784 = vmax.f32 %v742, 0.0
      %v785 = vmax.f32 %v744, 0.0
      %v786 = vmax.f32 %v747, 0.0
      %v787 = vmax.f32 %v749, 0.0
      %v788 = vmax.f32 %v752, 0.0
      %v789 = vmax.f32 %v754, 0.0
      %v791 = vperm.slane %v757, 0
      %v793 = vmul.f32 %v758, %v791
      %v794 = vmul.f32 %v759, %v791
      %v795 = vmul.f32 %v760, %v791
      %v796 = vmul.f32 %v761, %v791
      %v797 = vmul.f32 %v762, %v791
      %v798 = vmul.f32 %v763, %v791
      %v799 = vmul.f32 %v764, %v791
      %v800 = vmul.f32 %v765, %v791
      %v801 = vmul.f32 %v766, %v791
      %v802 = vmul.f32 %v767, %v791
      %v803 = vmul.f32 %v768, %v791
      %v804 = vmul.f32 %v769, %v791
      %v805 = vmul.f32 %v770, %v791
      %v806 = vmul.f32 %v771, %v791
      %v807 = vmul.f32 %v772, %v791
      %v808 = vmul.f32 %v773, %v791
      %v809 = vmul.f32 %v774, %v791
      %v810 = vmul.f32 %v775, %v791
      %v811 = vmul.f32 %v776, %v791
      %v812 = vmul.f32 %v777, %v791
      %v813 = vmul.f32 %v778, %v791
      %v814 = vmul.f32 %v779, %v791
      %v815 = vmul.f32 %v780, %v791
      %v816 = vmul.f32 %v781, %v791
      %v817 = vmul.f32 %v782, %v791
      %v818 = vmul.f32 %v783, %v791
      %v819 = vmul.f32 %v784, %v791
      %v820 = vmul.f32 %v785, %v791
      %v821 = vmul.f32 %v786, %v791
      %v822 = vmul.f32 %v787, %v791
      %v823 = vmul.f32 %v788, %v791
      %v824 = vmul.f32 %v789, %v791
      %v826 = vperm.slane %v756, 0
      %v828 = vadd.f32 %v793, %v826
      %v829 = vadd.f32 %v794, %v826
      %v830 = vadd.f32 %v795, %v826
      %v831 = vadd.f32 %v796, %v826
      %v832 = vadd.f32 %v797, %v826
      %v833 = vadd.f32 %v798, %v826
      %v834 = vadd.f32 %v799, %v826
      %v835 = vadd.f32 %v800, %v826
      %v836 = vadd.f32 %v801, %v826
      %v837 = vadd.f32 %v802, %v826
      %v838 = vadd.f32 %v803, %v826
      %v839 = vadd.f32 %v804, %v826
      %v840 = vadd.f32 %v805, %v826
      %v841 = vadd.f32 %v806, %v826
      %v842 = vadd.f32 %v807, %v826
      %v843 = vadd.f32 %v808, %v826
      %v844 = vadd.f32 %v809, %v826
      %v845 = vadd.f32 %v810, %v826
      %v846 = vadd.f32 %v811, %v826
      %v847 = vadd.f32 %v812, %v826
      %v848 = vadd.f32 %v813, %v826
      %v849 = vadd.f32 %v814, %v826
      %v850 = vadd.f32 %v815, %v826
      %v851 = vadd.f32 %v816, %v826
      %v852 = vadd.f32 %v817, %v826
      %v853 = vadd.f32 %v818, %v826
      %v854 = vadd.f32 %v819, %v826
      %v855 = vadd.f32 %v820, %v826
      %v856 = vadd.f32 %v821, %v826
      %v857 = vadd.f32 %v822, %v826
      %v858 = vadd.f32 %v823, %v826
      %v859 = vadd.f32 %v824, %v826
      %v860 = vpack.c.bf16 %v828, %v828
      %v861 = vpack.c.bf16 %v829, %v829
      %v862 = vpack.c.bf16 %v830, %v830
      %v863 = vpack.c.bf16 %v831, %v831
      %v864 = vpack.c.bf16 %v832, %v832
      %v865 = vpack.c.bf16 %v833, %v833
      %v866 = vpack.c.bf16 %v834, %v834
      %v867 = vpack.c.bf16 %v835, %v835
      %v868 = vpack.c.bf16 %v836, %v836
      %v869 = vpack.c.bf16 %v837, %v837
      %v870 = vpack.c.bf16 %v838, %v838
      %v871 = vpack.c.bf16 %v839, %v839
      %v872 = vpack.c.bf16 %v840, %v840
      %v873 = vpack.c.bf16 %v841, %v841
      %v874 = vpack.c.bf16 %v842, %v842
      %v875 = vpack.c.bf16 %v843, %v843
      %v876 = vpack.c.bf16 %v844, %v844
      %v877 = vpack.c.bf16 %v845, %v845
      %v878 = vpack.c.bf16 %v846, %v846
      %v879 = vpack.c.bf16 %v847, %v847
      %v880 = vpack.c.bf16 %v848, %v848
      %v881 = vpack.c.bf16 %v849, %v849
      %v882 = vpack.c.bf16 %v850, %v850
      %v883 = vpack.c.bf16 %v851, %v851
      %v884 = vpack.c.bf16 %v852, %v852
      %v885 = vpack.c.bf16 %v853, %v853
      %v886 = vpack.c.bf16 %v854, %v854
      %v887 = vpack.c.bf16 %v855, %v855
      %v888 = vpack.c.bf16 %v856, %v856
      %v889 = vpack.c.bf16 %v857, %v857
      %v890 = vpack.c.bf16 %v858, %v858
      %v891 = vpack.c.bf16 %v859, %v859
      %vm892 = vcmask 519168
      %893 = vst.msk [vmem:[%s267] sm:$0xf] %vm892, %v860
      %894 = vst.msk [vmem:[%s267 + $0x4] sm:$0xf] %vm892, %v861
      %895 = vst.msk [vmem:[%s267 + $0x8] sm:$0xf] %vm892, %v862
      %896 = vst.msk [vmem:[%s267 + $0xc] sm:$0xf] %vm892, %v863
      %897 = vst.msk [vmem:[%s267 + $0x10] sm:$0xf] %vm892, %v864
      %898 = vst.msk [vmem:[%s267 + $0x14] sm:$0xf] %vm892, %v865
      %899 = vst.msk [vmem:[%s267 + $0x18] sm:$0xf] %vm892, %v866
      %900 = vst.msk [vmem:[%s267 + $0x1c] sm:$0xf] %vm892, %v867
      %901 = vst.msk [vmem:[%s267 + $0x20] sm:$0xf] %vm892, %v868
      %902 = vst.msk [vmem:[%s267 + $0x24] sm:$0xf] %vm892, %v869
      %903 = vst.msk [vmem:[%s267 + $0x28] sm:$0xf] %vm892, %v870
      %904 = vst.msk [vmem:[%s267 + $0x2c] sm:$0xf] %vm892, %v871
      %905 = vst.msk [vmem:[%s267 + $0x30] sm:$0xf] %vm892, %v872
      %906 = vst.msk [vmem:[%s267 + $0x34] sm:$0xf] %vm892, %v873
      %907 = vst.msk [vmem:[%s267 + $0x38] sm:$0xf] %vm892, %v874
      %908 = vst.msk [vmem:[%s267 + $0x3c] sm:$0xf] %vm892, %v875
      %909 = vst.msk [vmem:[%s267 + $0x40] sm:$0xf] %vm892, %v876
      %910 = vst.msk [vmem:[%s267 + $0x44] sm:$0xf] %vm892, %v877
      %911 = vst.msk [vmem:[%s267 + $0x48] sm:$0xf] %vm892, %v878
      %912 = vst.msk [vmem:[%s267 + $0x4c] sm:$0xf] %vm892, %v879
      %913 = vst.msk [vmem:[%s267 + $0x50] sm:$0xf] %vm892, %v880
      %914 = vst.msk [vmem:[%s267 + $0x54] sm:$0xf] %vm892, %v881
      %915 = vst.msk [vmem:[%s267 + $0x58] sm:$0xf] %vm892, %v882
      %916 = vst.msk [vmem:[%s267 + $0x5c] sm:$0xf] %vm892, %v883
      %917 = vst.msk [vmem:[%s267 + $0x60] sm:$0xf] %vm892, %v884
      %918 = vst.msk [vmem:[%s267 + $0x64] sm:$0xf] %vm892, %v885
      %919 = vst.msk [vmem:[%s267 + $0x68] sm:$0xf] %vm892, %v886
      %920 = vst.msk [vmem:[%s267 + $0x6c] sm:$0xf] %vm892, %v887
      %921 = vst.msk [vmem:[%s267 + $0x70] sm:$0xf] %vm892, %v888
      %922 = vst.msk [vmem:[%s267 + $0x74] sm:$0xf] %vm892, %v889
      %923 = vst.msk [vmem:[%s267 + $0x78] sm:$0xf] %vm892, %v890
      %924 = vst.msk [vmem:[%s267 + $0x7c] sm:$0xf] %vm892, %v891
      %s925 = smul.u32 32, %s19
      %p926 = scmp.lt.s32.totalorder %s925, 63
      %s927 = scalar_select %p926, %s925, 63
      %p928 = scmp.lt.s32.totalorder %s20, 0
      %s929 = scalar_select %p928, %s20, 0
      %s930 = sadd.s32 %s929, %s927
      %s931 = smul.addr %s930, 4
      %s932 = scalar_lea.vmem %s4, %s931
      // Predicated region
      $region37: #{conv_bn_act.1} parent=35 // pred_check
        %p933 = pneg %p151
      $region38: #{conv_bn_act.1} parent=35 // pred_check_branch
        %935 = sbr.rel (%p933) target = $region40
      $region39: #{conv_bn_act.1} parent=35 // pred_region
        %s936 = smul.u32 32, %s19
      $region40: #{conv_bn_act.1} parent=35 // pred_fallthru
        _
    $region36: #{conv_bn_act.1} parent=5 // pred_fallthru
      _
    %p937 = scmp.le.s32.totalorder 2, %s10
    // Predicated region
    $region41: #{conv_bn_act.1} parent=5 // pred_check
      %p938 = pneg %p937
    $region42: #{conv_bn_act.1} parent=5 // pred_check_branch
      %940 = sbr.rel (%p938) target = $region44
    $region43: #{conv_bn_act.1} parent=5 // pred_region
      %s941 = ssub.s32 %s10, 2
      // Predicated region
      $region45: #{conv_bn_act.1} parent=43 // pred_check
        %p942 = pneg %p157
      $region46: #{conv_bn_act.1} parent=43 // pred_check_branch
        %944 = sbr.rel (%p942) target = $region48
      $region47: #{conv_bn_act.1} parent=43 // pred_region
        %s945 = smul.u32 32, %s21
        %p946 = scmp.lt.s32.totalorder %s945, 63
        %s947 = scalar_select %p946, %s945, 63
        %p948 = scmp.lt.s32.totalorder %s22, 0
        %s949 = scalar_select %p948, %s22, 0
        %s950 = sadd.s32 %s949, %s947
        %s951 = smul.addr %s950, 4
        %s952 = scalar_lea.vmem %s4, %s951
      $region48: #{conv_bn_act.1} parent=43 // pred_fallthru
        _
    $region44: #{conv_bn_act.1} parent=5 // pred_fallthru
      _
  $region6: #{conv_bn_act.1} parent=0 // loop_footer
    %s14 = sadd.s32 1, %s10
  $region7: #{conv_bn_act.1} parent=0 // loop_footer_branch
    %9 = sbr.rel target = $region3
  $region8: #{conv_bn_act.1} parent=0 // loop_exit
    _

</llo_original>
